<compile_context>
chip_gen: v5e
topology: v5e:2x2
jax: 0.10.0
libtpu: 0.0.40
codegen_flags: <defaults>
</compile_context>

<pallas_src>
import functools

import jax
import jax.numpy as jnp
from jax import lax
from jax.experimental import pallas as pl
from jax.experimental.pallas import tpu as pltpu


def _round_up(v: int, m: int) -> int:
    return (v + m - 1) // m * m


# ---------------------------------------------------------------------------
# Kernel 1 (one shot, whole arrays): weight_norm(dim=0) + scale_factor fold.
#   W_scaled[i, :] = scale_factor * g[i] * v[i, :] / ||v[i, :]||_2
# Runs once per forward, so the batch-tiled kernel never redoes the O*C
# normalization (it was previously re-executed on every grid step).
# ---------------------------------------------------------------------------
def weight_prep_kernel(wv_ref, wg_ref, w_ref, *, scale_factor):
    wv = wv_ref[...].astype(jnp.float32)
    wg = wg_ref[...].astype(jnp.float32)
    sq = jnp.sum(wv * wv, axis=1, keepdims=True)
    # Padded (all-zero) rows must not produce NaN/Inf -> guard the rsqrt.
    inv_norm = jnp.where(sq > 0.0, lax.rsqrt(sq), 0.0)
    w_ref[...] = (scale_factor * wg * inv_norm * wv).astype(w_ref.dtype)


# ---------------------------------------------------------------------------
# Kernel 2 (grid over batch tiles): row-normalize x, matmul with pre-scaled
# resident weight (no transpose), bf16 MXU operands, f32 accumulation.
# ---------------------------------------------------------------------------
def distlinear_kernel(x_ref, w_ref, o_ref, *, mxu_dtype):
    x = x_ref[...].astype(jnp.float32)
    # torch.norm(x, p=2, dim=1) + 1e-5 (eps added to the norm, not norm^2).
    norm = jnp.sqrt(jnp.sum(x * x, axis=1, keepdims=True))
    inv = pl.reciprocal(norm + 1e-5, approx=True)        # EUP slot, not VALU
    x_normalized = (x * inv).astype(mxu_dtype)

    # score = x_normalized @ W_scaled.T without materializing a transpose:
    # contract dim 1 of both operands so W stays in its native [O, C] layout.
    o_ref[...] = lax.dot_general(
        x_normalized, w_ref[...],
        dimension_numbers=(((1,), (1,)), ((), ())),
        preferred_element_type=jnp.float32,
    ).astype(o_ref.dtype)


def dist_linear_forward(x, weight_v, weight_g, *, out_channel, tile_n=None,
                        mxu_dtype=jnp.bfloat16):
    """DistLinear.forward(x, _, is_training=True) on TPU via Pallas."""
    n, c = x.shape
    o, c2 = weight_v.shape
    assert c == c2 and o == out_channel
    assert weight_g.shape == (o, 1)
    scale_factor = 2.0 if out_channel <= 200 else 10.0

    # Lane-dense output: pad O up to a multiple of 128 (unmasked vst).
    o_pad = _round_up(o, 128)

    # Batch tiling: 512-row tiles (multiple of 8) -> pipelining + v7x megacore.
    n_pad = _round_up(n, 8)
    if tile_n is None:
        tile_n = min(512, n_pad)
    tile_n = min(_round_up(tile_n, 8), n_pad)
    n_pad = _round_up(n_pad, tile_n)

    x_p = x if n_pad == n else jnp.pad(x, ((0, n_pad - n), (0, 0)))
    wv_p = weight_v if o_pad == o else jnp.pad(weight_v, ((0, o_pad - o), (0, 0)))
    wg_p = weight_g if o_pad == o else jnp.pad(weight_g, ((0, o_pad - o), (0, 0)))

    # --- one-shot weight normalization (whole arrays, no grid) ---
    w_scaled = pl.pallas_call(
        functools.partial(weight_prep_kernel, scale_factor=scale_factor),
        out_shape=jax.ShapeDtypeStruct((o_pad, c), mxu_dtype),
    )(wv_p, wg_p)

    # --- batch-tiled normalized matmul ---
    grid = (n_pad // tile_n,)
    w_bytes = jnp.dtype(mxu_dtype).itemsize
    vmem_bytes = (2 * tile_n * c * 4            # double-buffered x tiles (f32)
                  + 2 * tile_n * o_pad * 4      # double-buffered out tiles (f32)
                  + 2 * o_pad * c * w_bytes     # resident weight (budget 2x)
                  + (4 << 20))                  # headroom
    vmem_bytes = int(max(16 << 20, min(vmem_bytes, 64 << 20)))
    # TODO(synk): if O*C ever outgrows VMEM, add an O-tile (and/or K-reduction
    # with a f32 accumulator) grid axis instead of keeping the weight resident.

    out = pl.pallas_call(
        functools.partial(distlinear_kernel, mxu_dtype=mxu_dtype),
        out_shape=jax.ShapeDtypeStruct((n_pad, o_pad), jnp.float32),
        grid_spec=pltpu.PrefetchScalarGridSpec(
            num_scalar_prefetch=0,
            grid=grid,
            in_specs=[
                pl.BlockSpec((tile_n, c), lambda i: (i, 0)),   # x tile
                pl.BlockSpec((o_pad, c), lambda i: (0, 0)),    # resident weight
            ],
            out_specs=pl.BlockSpec((tile_n, o_pad), lambda i: (i, 0)),
        ),
        compiler_params=pltpu.CompilerParams(
            dimension_semantics=("parallel",),
            vmem_limit_bytes=vmem_bytes,
        ),
    )(x_p, w_scaled)

    return out[:n, :o]


def dist_linear_reference(x, weight_v, weight_g, *, out_channel):
    """Pure-JAX reference for correctness checking."""
    scale_factor = 2.0 if out_channel <= 200 else 10.0
    x_norm = jnp.linalg.norm(x, axis=1, keepdims=True)
    x_normalized = x / (x_norm + 1e-5)
    w = weight_g * weight_v / jnp.linalg.norm(weight_v, axis=1, keepdims=True)
    return scale_factor * (x_normalized @ w.T)


if __name__ == "__main__":
    # Small, deterministic shapes: batch=8, in_channel=32, out_channel=16.
    key = jax.random.PRNGKey(0)
    k_x, k_w = jax.random.split(key, 2)

    batch = 8
    in_channel = 32
    out_channel = 16  # <= 200 -> scale_factor = 2

    x = jax.random.normal(k_x, (batch, in_channel), dtype=jnp.float32)

    # weight_norm init: v ~ original weight, g = ||v|| per row (so W == v at init).
    weight_v = jax.random.normal(k_w, (out_channel, in_channel), dtype=jnp.float32) * 0.1
    weight_g = jnp.linalg.norm(weight_v, axis=1, keepdims=True)  # (out_channel, 1)

    # TODO(synk): the is_training=False branch fits/predicts an sklearn
    # LogisticRegression (self.testing) — iterative CPU-side solver with no
    # clean Pallas equivalent; only the is_training=True path is implemented.

    out = dist_linear_forward(x, weight_v, weight_g, out_channel=out_channel)
    out = jax.block_until_ready(out)

    ref = dist_linear_reference(x, weight_v, weight_g, out_channel=out_channel)
    assert out.shape == (batch, out_channel)
    # bf16 MXU operands + approx reciprocal -> relaxed tolerance vs f32 reference.
    assert jnp.allclose(out, ref, atol=2e-2, rtol=2e-2), "mismatch vs reference"

    print("KERNEL_OK")
</pallas_src>

<mosaic_0001>
module attributes {stable_mosaic.version = 11 : i64} {
  func.func @weight_prep_kernel(%arg0: memref<128x32xf32, #tpu.memory_space<vmem>>, %arg1: memref<128x1xf32, #tpu.memory_space<vmem>>, %arg2: memref<128x32xbf16, #tpu.memory_space<vmem>>) attributes {dimension_semantics = [], scalar_prefetch = 0 : i64, scratch_operands = 0 : i64, tpu.core_type = #tpu.core_type<tc>} {
    %c0 = arith.constant 0 : index
    %c0_0 = arith.constant 0 : index
    %0 = vector.load %arg0[%c0, %c0_0] : memref<128x32xf32, #tpu.memory_space<vmem>>, vector<128x32xf32>
    %c0_1 = arith.constant 0 : index
    %c0_2 = arith.constant 0 : index
    %1 = vector.load %arg1[%c0_1, %c0_2] : memref<128x1xf32, #tpu.memory_space<vmem>>, vector<128x1xf32>
    %2 = arith.mulf %0, %0 : vector<128x32xf32>
    %cst = arith.constant dense<0.000000e+00> : vector<128xf32>
    %3 = vector.multi_reduction <add>, %2, %cst [1] : vector<128x32xf32> to vector<128xf32>
    %4 = vector.shape_cast %3 : vector<128xf32> to vector<128x1xf32>
    %cst_3 = arith.constant 0.000000e+00 : f32
    %5 = vector.broadcast %cst_3 : f32 to vector<128x1xf32>
    %6 = arith.cmpf ogt, %4, %5 : vector<128x1xf32>
    %7 = math.rsqrt %4 : vector<128x1xf32>
    %cst_4 = arith.constant 0.000000e+00 : f32
    %8 = vector.broadcast %cst_4 : f32 to vector<128x1xf32>
    %9 = arith.select %6, %7, %8 : vector<128x1xi1>, vector<128x1xf32>
    %cst_5 = arith.constant 2.000000e+00 : f32
    %10 = vector.broadcast %cst_5 : f32 to vector<128x1xf32>
    %11 = arith.mulf %10, %1 : vector<128x1xf32>
    %12 = arith.mulf %11, %9 : vector<128x1xf32>
    %13 = vector.broadcast %12 : vector<128x1xf32> to vector<128x32xf32>
    %14 = arith.mulf %13, %0 : vector<128x32xf32>
    %15 = arith.truncf %14 : vector<128x32xf32> to vector<128x32xbf16>
    %c0_6 = arith.constant 0 : index
    %c0_7 = arith.constant 0 : index
    %16 = vector.load %arg2[%c0_6, %c0_7] : memref<128x32xbf16, #tpu.memory_space<vmem>>, vector<128x32xbf16>
    tpu.vector_store %arg2[%c0_6, %c0_7], %15 {strides = array<i32>} : memref<128x32xbf16, #tpu.memory_space<vmem>>, vector<128x32xbf16>,
    return
  }
}

</mosaic_0001>

<llo_original>
// kernel: tpu_custom_call.1
$region0: #{tpu_custom_call.1}
  #allocation0 [shape = 'u32[]', space=smem, size = 0x4, offset = 0x4, fixed_abs, tag = 'smem constant byte address 0x4 - core index']
  #allocation1 [shape = 'u32[72,128]{1,0:T(1,128)}', space=vmem, size = 0x9000, scoped, tag = 'internal scratch']
  %s0 = inlined_call_operand.vmem [shape: f32[128,32], index: 0, kind: input, shape index: {}]
  %s1 = inlined_call_operand.vmem [shape: f32[128,1], index: 1, kind: input, shape index: {}]
  %s2 = inlined_call_operand.vmem [shape: bf16[128,32], index: 2, kind: output, shape index: {}]
  %s3 = sld [smem:[#allocation0]]
  $region18: #{tpu_custom_call.1} parent=0
    _
  %s5 = ssub.s32 1, %s3
  %s6 = scalar_select 0, %s5, %s3
  // Predicated region
  $region2: #{tpu_custom_call.1} parent=0 // pred_check
    _
  $region3: #{tpu_custom_call.1} parent=0 // pred_check_branch
    %8 = sbr.rel (0) target = $region5
  $region4: #{tpu_custom_call.1} parent=0 // pred_region
    _
  $region5: #{tpu_custom_call.1} parent=0 // pred_fallthru
    _
  // Predicated region
  $region6: #{tpu_custom_call.1} parent=0 // pred_check
    _
  $region7: #{tpu_custom_call.1} parent=0 // pred_check_branch
    %10 = sbr.rel (0) target = $region9
  $region8: #{tpu_custom_call.1} parent=0 // pred_region
    _
  $region9: #{tpu_custom_call.1} parent=0 // pred_fallthru
    _
  %v11 = vld [vmem:[%s0] sm:$0xff]
  %v12 = vld [vmem:[%s0 + $0x8] sm:$0xff]
  %v13 = vld [vmem:[%s0 + $0x10] sm:$0xff]
  %v14 = vld [vmem:[%s0 + $0x18] sm:$0xff]
  %v15 = vld [vmem:[%s0 + $0x20] sm:$0xff]
  %v16 = vld [vmem:[%s0 + $0x28] sm:$0xff]
  %v17 = vld [vmem:[%s0 + $0x30] sm:$0xff]
  %v18 = vld [vmem:[%s0 + $0x38] sm:$0xff]
  %v19 = vld [vmem:[%s0 + $0x40] sm:$0xff]
  %v20 = vld [vmem:[%s0 + $0x48] sm:$0xff]
  %v21 = vld [vmem:[%s0 + $0x50] sm:$0xff]
  %v22 = vld [vmem:[%s0 + $0x58] sm:$0xff]
  %v23 = vld [vmem:[%s0 + $0x60] sm:$0xff]
  %v24 = vld [vmem:[%s0 + $0x68] sm:$0xff]
  %v25 = vld [vmem:[%s0 + $0x70] sm:$0xff]
  %v26 = vld [vmem:[%s0 + $0x78] sm:$0xff]
  %v27 = vld [vmem:[%s1] sm:$0xff]
  %v28 = vld [vmem:[%s1 + $0x8] sm:$0xff]
  %v29 = vld [vmem:[%s1 + $0x10] sm:$0xff]
  %v30 = vld [vmem:[%s1 + $0x18] sm:$0xff]
  %v31 = vld [vmem:[%s1 + $0x20] sm:$0xff]
  %v32 = vld [vmem:[%s1 + $0x28] sm:$0xff]
  %v33 = vld [vmem:[%s1 + $0x30] sm:$0xff]
  %v34 = vld [vmem:[%s1 + $0x38] sm:$0xff]
  %v35 = vld [vmem:[%s1 + $0x40] sm:$0xff]
  %v36 = vld [vmem:[%s1 + $0x48] sm:$0xff]
  %v37 = vld [vmem:[%s1 + $0x50] sm:$0xff]
  %v38 = vld [vmem:[%s1 + $0x58] sm:$0xff]
  %v39 = vld [vmem:[%s1 + $0x60] sm:$0xff]
  %v40 = vld [vmem:[%s1 + $0x68] sm:$0xff]
  %v41 = vld [vmem:[%s1 + $0x70] sm:$0xff]
  %v42 = vld [vmem:[%s1 + $0x78] sm:$0xff]
  %v43 = vmul.f32 %v11, %v11
  %v44 = vmul.f32 %v12, %v12
  %v45 = vmul.f32 %v13, %v13
  %v46 = vmul.f32 %v14, %v14
  %v47 = vmul.f32 %v15, %v15
  %v48 = vmul.f32 %v16, %v16
  %v49 = vmul.f32 %v17, %v17
  %v50 = vmul.f32 %v18, %v18
  %v51 = vmul.f32 %v19, %v19
  %v52 = vmul.f32 %v20, %v20
  %v53 = vmul.f32 %v21, %v21
  %v54 = vmul.f32 %v22, %v22
  %v55 = vmul.f32 %v23, %v23
  %v56 = vmul.f32 %v24, %v24
  %v57 = vmul.f32 %v25, %v25
  %v58 = vmul.f32 %v26, %v26
  %vm59 = vcmask 261120
  %v60 = vsel %vm59, %v43, 0.0
  %61 = vadd.xlane.f32.xlu0 %v60
  %v62 = vpop.xlane.xlu0 %61
  %v63 = vsel %vm59, %v44, 0.0
  %64 = vadd.xlane.f32.xlu0 %v63
  %v65 = vpop.xlane.xlu0 %64
  %v66 = vsel %vm59, %v45, 0.0
  %67 = vadd.xlane.f32.xlu0 %v66
  %v68 = vpop.xlane.xlu0 %67
  %v69 = vsel %vm59, %v46, 0.0
  %70 = vadd.xlane.f32.xlu0 %v69
  %v71 = vpop.xlane.xlu0 %70
  %v72 = vsel %vm59, %v47, 0.0
  %73 = vadd.xlane.f32.xlu0 %v72
  %v74 = vpop.xlane.xlu0 %73
  %v75 = vsel %vm59, %v48, 0.0
  %76 = vadd.xlane.f32.xlu0 %v75
  %v77 = vpop.xlane.xlu0 %76
  %v78 = vsel %vm59, %v49, 0.0
  %79 = vadd.xlane.f32.xlu0 %v78
  %v80 = vpop.xlane.xlu0 %79
  %v81 = vsel %vm59, %v50, 0.0
  %82 = vadd.xlane.f32.xlu0 %v81
  %v83 = vpop.xlane.xlu0 %82
  %v84 = vsel %vm59, %v51, 0.0
  %85 = vadd.xlane.f32.xlu0 %v84
  %v86 = vpop.xlane.xlu0 %85
  %v87 = vsel %vm59, %v52, 0.0
  %88 = vadd.xlane.f32.xlu0 %v87
  %v89 = vpop.xlane.xlu0 %88
  %v90 = vsel %vm59, %v53, 0.0
  %91 = vadd.xlane.f32.xlu0 %v90
  %v92 = vpop.xlane.xlu0 %91
  %v93 = vsel %vm59, %v54, 0.0
  %94 = vadd.xlane.f32.xlu0 %v93
  %v95 = vpop.xlane.xlu0 %94
  %v96 = vsel %vm59, %v55, 0.0
  %97 = vadd.xlane.f32.xlu0 %v96
  %v98 = vpop.xlane.xlu0 %97
  %v99 = vsel %vm59, %v56, 0.0
  %100 = vadd.xlane.f32.xlu0 %v99
  %v101 = vpop.xlane.xlu0 %100
  %v102 = vsel %vm59, %v57, 0.0
  %103 = vadd.xlane.f32.xlu0 %v102
  %v104 = vpop.xlane.xlu0 %103
  %v105 = vsel %vm59, %v58, 0.0
  %106 = vadd.xlane.f32.xlu0 %v105
  %v107 = vpop.xlane.xlu0 %106
  %vm108 = vcmp.gt.f32.partialorder %v62, 0.0
  %vm109 = vcmp.gt.f32.partialorder %v65, 0.0
  %vm110 = vcmp.gt.f32.partialorder %v68, 0.0
  %vm111 = vcmp.gt.f32.partialorder %v71, 0.0
  %vm112 = vcmp.gt.f32.partialorder %v74, 0.0
  %vm113 = vcmp.gt.f32.partialorder %v77, 0.0
  %vm114 = vcmp.gt.f32.partialorder %v80, 0.0
  %vm115 = vcmp.gt.f32.partialorder %v83, 0.0
  %vm116 = vcmp.gt.f32.partialorder %v86, 0.0
  %vm117 = vcmp.gt.f32.partialorder %v89, 0.0
  %vm118 = vcmp.gt.f32.partialorder %v92, 0.0
  %vm119 = vcmp.gt.f32.partialorder %v95, 0.0
  %vm120 = vcmp.gt.f32.partialorder %v98, 0.0
  %vm121 = vcmp.gt.f32.partialorder %v101, 0.0
  %vm122 = vcmp.gt.f32.partialorder %v104, 0.0
  %vm123 = vcmp.gt.f32.partialorder %v107, 0.0
  %v124 = vrsqrt.pop %v62
  %v125 = vmul.f32 %v124, %v62
  %v126 = vmul.f32 %v125, %v124
  %v127 = vmul.f32 0.5, %v126
  %v128 = vsub.f32 1.5, %v127
  %v129 = vmul.f32 %v124, %v128
  %vm130 = vweird.f32 %v62
  %vm131 = vweird.f32 %v124
  %vm132 = vmor %vm130, %vm131
  %v133 = vsel %vm132, %v124, %v129
  %v134 = vrsqrt.pop %v65
  %v135 = vmul.f32 %v134, %v65
  %v136 = vmul.f32 %v135, %v134
  %v137 = vmul.f32 0.5, %v136
  %v138 = vsub.f32 1.5, %v137
  %v139 = vmul.f32 %v134, %v138
  %vm140 = vweird.f32 %v65
  %vm141 = vweird.f32 %v134
  %vm142 = vmor %vm140, %vm141
  %v143 = vsel %vm142, %v134, %v139
  %v144 = vrsqrt.pop %v68
  %v145 = vmul.f32 %v144, %v68
  %v146 = vmul.f32 %v145, %v144
  %v147 = vmul.f32 0.5, %v146
  %v148 = vsub.f32 1.5, %v147
  %v149 = vmul.f32 %v144, %v148
  %vm150 = vweird.f32 %v68
  %vm151 = vweird.f32 %v144
  %vm152 = vmor %vm150, %vm151
  %v153 = vsel %vm152, %v144, %v149
  %v154 = vrsqrt.pop %v71
  %v155 = vmul.f32 %v154, %v71
  %v156 = vmul.f32 %v155, %v154
  %v157 = vmul.f32 0.5, %v156
  %v158 = vsub.f32 1.5, %v157
  %v159 = vmul.f32 %v154, %v158
  %vm160 = vweird.f32 %v71
  %vm161 = vweird.f32 %v154
  %vm162 = vmor %vm160, %vm161
  %v163 = vsel %vm162, %v154, %v159
  %v164 = vrsqrt.pop %v74
  %v165 = vmul.f32 %v164, %v74
  %v166 = vmul.f32 %v165, %v164
  %v167 = vmul.f32 0.5, %v166
  %v168 = vsub.f32 1.5, %v167
  %v169 = vmul.f32 %v164, %v168
  %vm170 = vweird.f32 %v74
  %vm171 = vweird.f32 %v164
  %vm172 = vmor %vm170, %vm171
  %v173 = vsel %vm172, %v164, %v169
  %v174 = vrsqrt.pop %v77
  %v175 = vmul.f32 %v174, %v77
  %v176 = vmul.f32 %v175, %v174
  %v177 = vmul.f32 0.5, %v176
  %v178 = vsub.f32 1.5, %v177
  %v179 = vmul.f32 %v174, %v178
  %vm180 = vweird.f32 %v77
  %vm181 = vweird.f32 %v174
  %vm182 = vmor %vm180, %vm181
  %v183 = vsel %vm182, %v174, %v179
  %v184 = vrsqrt.pop %v80
  %v185 = vmul.f32 %v184, %v80
  %v186 = vmul.f32 %v185, %v184
  %v187 = vmul.f32 0.5, %v186
  %v188 = vsub.f32 1.5, %v187
  %v189 = vmul.f32 %v184, %v188
  %vm190 = vweird.f32 %v80
  %vm191 = vweird.f32 %v184
  %vm192 = vmor %vm190, %vm191
  %v193 = vsel %vm192, %v184, %v189
  %v194 = vrsqrt.pop %v83
  %v195 = vmul.f32 %v194, %v83
  %v196 = vmul.f32 %v195, %v194
  %v197 = vmul.f32 0.5, %v196
  %v198 = vsub.f32 1.5, %v197
  %v199 = vmul.f32 %v194, %v198
  %vm200 = vweird.f32 %v83
  %vm201 = vweird.f32 %v194
  %vm202 = vmor %vm200, %vm201
  %v203 = vsel %vm202, %v194, %v199
  %v204 = vrsqrt.pop %v86
  %v205 = vmul.f32 %v204, %v86
  %v206 = vmul.f32 %v205, %v204
  %v207 = vmul.f32 0.5, %v206
  %v208 = vsub.f32 1.5, %v207
  %v209 = vmul.f32 %v204, %v208
  %vm210 = vweird.f32 %v86
  %vm211 = vweird.f32 %v204
  %vm212 = vmor %vm210, %vm211
  %v213 = vsel %vm212, %v204, %v209
  %v214 = vrsqrt.pop %v89
  %v215 = vmul.f32 %v214, %v89
  %v216 = vmul.f32 %v215, %v214
  %v217 = vmul.f32 0.5, %v216
  %v218 = vsub.f32 1.5, %v217
  %v219 = vmul.f32 %v214, %v218
  %vm220 = vweird.f32 %v89
  %vm221 = vweird.f32 %v214
  %vm222 = vmor %vm220, %vm221
  %v223 = vsel %vm222, %v214, %v219
  %v224 = vrsqrt.pop %v92
  %v225 = vmul.f32 %v224, %v92
  %v226 = vmul.f32 %v225, %v224
  %v227 = vmul.f32 0.5, %v226
  %v228 = vsub.f32 1.5, %v227
  %v229 = vmul.f32 %v224, %v228
  %vm230 = vweird.f32 %v92
  %vm231 = vweird.f32 %v224
  %vm232 = vmor %vm230, %vm231
  %v233 = vsel %vm232, %v224, %v229
  %v234 = vrsqrt.pop %v95
  %v235 = vmul.f32 %v234, %v95
  %v236 = vmul.f32 %v235, %v234
  %v237 = vmul.f32 0.5, %v236
  %v238 = vsub.f32 1.5, %v237
  %v239 = vmul.f32 %v234, %v238
  %vm240 = vweird.f32 %v95
  %vm241 = vweird.f32 %v234
  %vm242 = vmor %vm240, %vm241
  %v243 = vsel %vm242, %v234, %v239
  %v244 = vrsqrt.pop %v98
  %v245 = vmul.f32 %v244, %v98
  %v246 = vmul.f32 %v245, %v244
  %v247 = vmul.f32 0.5, %v246
  %v248 = vsub.f32 1.5, %v247
  %v249 = vmul.f32 %v244, %v248
  %vm250 = vweird.f32 %v98
  %vm251 = vweird.f32 %v244
  %vm252 = vmor %vm250, %vm251
  %v253 = vsel %vm252, %v244, %v249
  %v254 = vrsqrt.pop %v101
  %v255 = vmul.f32 %v254, %v101
  %v256 = vmul.f32 %v255, %v254
  %v257 = vmul.f32 0.5, %v256
  %v258 = vsub.f32 1.5, %v257
  %v259 = vmul.f32 %v254, %v258
  %vm260 = vweird.f32 %v101
  %vm261 = vweird.f32 %v254
  %vm262 = vmor %vm260, %vm261
  %v263 = vsel %vm262, %v254, %v259
  %v264 = vrsqrt.pop %v104
  %v265 = vmul.f32 %v264, %v104
  %v266 = vmul.f32 %v265, %v264
  %v267 = vmul.f32 0.5, %v266
  %v268 = vsub.f32 1.5, %v267
  %v269 = vmul.f32 %v264, %v268
  %vm270 = vweird.f32 %v104
  %vm271 = vweird.f32 %v264
  %vm272 = vmor %vm270, %vm271
  %v273 = vsel %vm272, %v264, %v269
  %v274 = vrsqrt.pop %v107
  %v275 = vmul.f32 %v274, %v107
  %v276 = vmul.f32 %v275, %v274
  %v277 = vmul.f32 0.5, %v276
  %v278 = vsub.f32 1.5, %v277
  %v279 = vmul.f32 %v274, %v278
  %vm280 = vweird.f32 %v107
  %vm281 = vweird.f32 %v274
  %vm282 = vmor %vm280, %vm281
  %v283 = vsel %vm282, %v274, %v279
  %v284 = vsel %vm108, %v133, 0.0
  %v285 = vsel %vm109, %v143, 0.0
  %v286 = vsel %vm110, %v153, 0.0
  %v287 = vsel %vm111, %v163, 0.0
  %v288 = vsel %vm112, %v173, 0.0
  %v289 = vsel %vm113, %v183, 0.0
  %v290 = vsel %vm114, %v193, 0.0
  %v291 = vsel %vm115, %v203, 0.0
  %v292 = vsel %vm116, %v213, 0.0
  %v293 = vsel %vm117, %v223, 0.0
  %v294 = vsel %vm118, %v233, 0.0
  %v295 = vsel %vm119, %v243, 0.0
  %v296 = vsel %vm120, %v253, 0.0
  %v297 = vsel %vm121, %v263, 0.0
  %v298 = vsel %vm122, %v273, 0.0
  %v299 = vsel %vm123, %v283, 0.0
  %v300 = vmul.f32 %v27, 2.0
  %v301 = vmul.f32 %v28, 2.0
  %v302 = vmul.f32 %v29, 2.0
  %v303 = vmul.f32 %v30, 2.0
  %v304 = vmul.f32 %v31, 2.0
  %v305 = vmul.f32 %v32, 2.0
  %v306 = vmul.f32 %v33, 2.0
  %v307 = vmul.f32 %v34, 2.0
  %v308 = vmul.f32 %v35, 2.0
  %v309 = vmul.f32 %v36, 2.0
  %v310 = vmul.f32 %v37, 2.0
  %v311 = vmul.f32 %v38, 2.0
  %v312 = vmul.f32 %v39, 2.0
  %v313 = vmul.f32 %v40, 2.0
  %v314 = vmul.f32 %v41, 2.0
  %v315 = vmul.f32 %v42, 2.0
  %v316 = vmul.f32 %v300, %v284
  %v317 = vmul.f32 %v301, %v285
  %v318 = vmul.f32 %v302, %v286
  %v319 = vmul.f32 %v303, %v287
  %v320 = vmul.f32 %v304, %v288
  %v321 = vmul.f32 %v305, %v289
  %v322 = vmul.f32 %v306, %v290
  %v323 = vmul.f32 %v307, %v291
  %v324 = vmul.f32 %v308, %v292
  %v325 = vmul.f32 %v309, %v293
  %v326 = vmul.f32 %v310, %v294
  %v327 = vmul.f32 %v311, %v295
  %v328 = vmul.f32 %v312, %v296
  %v329 = vmul.f32 %v313, %v297
  %v330 = vmul.f32 %v314, %v298
  %v331 = vmul.f32 %v315, %v299
  %333 = vset.pattern.permute.xlu0 0
  %334 = vperm.xlu0 %333, %v316
  %v335 = vpop.permute.xlu0 %334
  %338 = vset.pattern.permute.xlu0 0
  %339 = vperm.xlu0 %338, %v317
  %v340 = vpop.permute.xlu0 %339
  %343 = vset.pattern.permute.xlu0 0
  %344 = vperm.xlu0 %343, %v318
  %v345 = vpop.permute.xlu0 %344
  %348 = vset.pattern.permute.xlu0 0
  %349 = vperm.xlu0 %348, %v319
  %v350 = vpop.permute.xlu0 %349
  %353 = vset.pattern.permute.xlu0 0
  %354 = vperm.xlu0 %353, %v320
  %v355 = vpop.permute.xlu0 %354
  %358 = vset.pattern.permute.xlu0 0
  %359 = vperm.xlu0 %358, %v321
  %v360 = vpop.permute.xlu0 %359
  %363 = vset.pattern.permute.xlu0 0
  %364 = vperm.xlu0 %363, %v322
  %v365 = vpop.permute.xlu0 %364
  %368 = vset.pattern.permute.xlu0 0
  %369 = vperm.xlu0 %368, %v323
  %v370 = vpop.permute.xlu0 %369
  %373 = vset.pattern.permute.xlu0 0
  %374 = vperm.xlu0 %373, %v324
  %v375 = vpop.permute.xlu0 %374
  %378 = vset.pattern.permute.xlu0 0
  %379 = vperm.xlu0 %378, %v325
  %v380 = vpop.permute.xlu0 %379
  %383 = vset.pattern.permute.xlu0 0
  %384 = vperm.xlu0 %383, %v326
  %v385 = vpop.permute.xlu0 %384
  %388 = vset.pattern.permute.xlu0 0
  %389 = vperm.xlu0 %388, %v327
  %v390 = vpop.permute.xlu0 %389
  %393 = vset.pattern.permute.xlu0 0
  %394 = vperm.xlu0 %393, %v328
  %v395 = vpop.permute.xlu0 %394
  %398 = vset.pattern.permute.xlu0 0
  %399 = vperm.xlu0 %398, %v329
  %v400 = vpop.permute.xlu0 %399
  %403 = vset.pattern.permute.xlu0 0
  %404 = vperm.xlu0 %403, %v330
  %v405 = vpop.permute.xlu0 %404
  %408 = vset.pattern.permute.xlu0 0
  %409 = vperm.xlu0 %408, %v331
  %v410 = vpop.permute.xlu0 %409
  %v412 = vmul.f32 %v335, %v11
  %v413 = vmul.f32 %v340, %v12
  %v414 = vmul.f32 %v345, %v13
  %v415 = vmul.f32 %v350, %v14
  %v416 = vmul.f32 %v355, %v15
  %v417 = vmul.f32 %v360, %v16
  %v418 = vmul.f32 %v365, %v17
  %v419 = vmul.f32 %v370, %v18
  %v420 = vmul.f32 %v375, %v19
  %v421 = vmul.f32 %v380, %v20
  %v422 = vmul.f32 %v385, %v21
  %v423 = vmul.f32 %v390, %v22
  %v424 = vmul.f32 %v395, %v23
  %v425 = vmul.f32 %v400, %v24
  %v426 = vmul.f32 %v405, %v25
  %v427 = vmul.f32 %v410, %v26
  %v428 = vpack.c.bf16 %v412, %v412
  %v429 = vpack.c.bf16 %v413, %v413
  %v430 = vpack.c.bf16 %v414, %v414
  %v431 = vpack.c.bf16 %v415, %v415
  %v432 = vpack.c.bf16 %v416, %v416
  %v433 = vpack.c.bf16 %v417, %v417
  %v434 = vpack.c.bf16 %v418, %v418
  %v435 = vpack.c.bf16 %v419, %v419
  %v436 = vpack.c.bf16 %v420, %v420
  %v437 = vpack.c.bf16 %v421, %v421
  %v438 = vpack.c.bf16 %v422, %v422
  %v439 = vpack.c.bf16 %v423, %v423
  %v440 = vpack.c.bf16 %v424, %v424
  %v441 = vpack.c.bf16 %v425, %v425
  %v442 = vpack.c.bf16 %v426, %v426
  %v443 = vpack.c.bf16 %v427, %v427
  %vm444 = vcmask 257024
  %445 = vst.msk [vmem:[%s2] sm:$0xf] %vm444, %v428
  %446 = vst.msk [vmem:[%s2 + $0x4] sm:$0xf] %vm444, %v429
  %447 = vst.msk [vmem:[%s2 + $0x8] sm:$0xf] %vm444, %v430
  %448 = vst.msk [vmem:[%s2 + $0xc] sm:$0xf] %vm444, %v431
  %449 = vst.msk [vmem:[%s2 + $0x10] sm:$0xf] %vm444, %v432
  %450 = vst.msk [vmem:[%s2 + $0x14] sm:$0xf] %vm444, %v433
  %451 = vst.msk [vmem:[%s2 + $0x18] sm:$0xf] %vm444, %v434
  %452 = vst.msk [vmem:[%s2 + $0x1c] sm:$0xf] %vm444, %v435
  %453 = vst.msk [vmem:[%s2 + $0x20] sm:$0xf] %vm444, %v436
  %454 = vst.msk [vmem:[%s2 + $0x24] sm:$0xf] %vm444, %v437
  %455 = vst.msk [vmem:[%s2 + $0x28] sm:$0xf] %vm444, %v438
  %456 = vst.msk [vmem:[%s2 + $0x2c] sm:$0xf] %vm444, %v439
  %457 = vst.msk [vmem:[%s2 + $0x30] sm:$0xf] %vm444, %v440
  %458 = vst.msk [vmem:[%s2 + $0x34] sm:$0xf] %vm444, %v441
  %459 = vst.msk [vmem:[%s2 + $0x38] sm:$0xf] %vm444, %v442
  %460 = vst.msk [vmem:[%s2 + $0x3c] sm:$0xf] %vm444, %v443
  // Predicated region
  $region10: #{tpu_custom_call.1} parent=0 // pred_check
    _
  $region11: #{tpu_custom_call.1} parent=0 // pred_check_branch
    %462 = sbr.rel (0) target = $region13
  $region12: #{tpu_custom_call.1} parent=0 // pred_region
    _
  $region13: #{tpu_custom_call.1} parent=0 // pred_fallthru
    _
  // Predicated region
  $region14: #{tpu_custom_call.1} parent=0 // pred_check
    _
  $region15: #{tpu_custom_call.1} parent=0 // pred_check_branch
    %464 = sbr.rel (0) target = $region17
  $region16: #{tpu_custom_call.1} parent=0 // pred_region
    _
  $region17: #{tpu_custom_call.1} parent=0 // pred_fallthru
    _

</llo_original>
